<compile_context>
chip_gen: v7x
topology: tpu7x:2x2x1
jax: 0.10.0
libtpu: 0.0.40
codegen_flags: <defaults>
</compile_context>

<pallas_src>
import jax
import jax.numpy as jnp
from jax.experimental import pallas as pl
from jax.experimental.pallas import tpu as pltpu


def critic_kernel(x_ref,
                  w0_ref, b0_ref,
                  w1_ref, b1_ref,
                  w2_ref, b2_ref,
                  w3_ref, b3_ref,
                  o_ref):
    # Layer 0: v = x @ W0 + b0 (no activation before it). bf16 inputs, f32 accumulation.
    v = jnp.dot(x_ref[...], w0_ref[...],
                preferred_element_type=jnp.float32) + b0_ref[...]
    # Hidden layers: v = relu(v) @ Wi + bi. Final layer output has NO relu.
    v = jnp.dot(jnp.maximum(v, 0.0).astype(jnp.bfloat16), w1_ref[...],
                preferred_element_type=jnp.float32) + b1_ref[...]
    v = jnp.dot(jnp.maximum(v, 0.0).astype(jnp.bfloat16), w2_ref[...],
                preferred_element_type=jnp.float32) + b2_ref[...]
    v = jnp.dot(jnp.maximum(v, 0.0).astype(jnp.bfloat16), w3_ref[...],
                preferred_element_type=jnp.float32) + b3_ref[...]
    o_ref[...] = v.astype(o_ref.dtype)


def make_critic_params(key, state_dim, action_dim, hidden_layers=(64, 32, 32)):
    """Kaiming-normal weights (fan_in, gain=sqrt(2) for relu), zero biases.
    Weights returned as (in, out) bf16; biases as (1, out) f32."""
    dims = [state_dim] + list(hidden_layers) + [action_dim]
    params = []
    for i in range(len(dims) - 1):
        fan_in, fan_out = dims[i], dims[i + 1]
        key, sub = jax.random.split(key)
        std = jnp.sqrt(2.0 / fan_in)
        w = (jax.random.normal(sub, (fan_in, fan_out), dtype=jnp.float32) * std
             ).astype(jnp.bfloat16)
        b = jnp.zeros((1, fan_out), dtype=jnp.float32)
        params.append((w, b))
    return params


def _round_up(x, m):
    return (x + m - 1) // m * m


def critic_forward(state, params, *, block_b=512):
    """state: (B, state_dim). Returns (B, action_dim) float32."""
    B, state_dim = state.shape
    (w0, b0), (w1, b1), (w2, b2), (w3, b3) = params
    action_dim = w3.shape[1]

    # Lane-dense output: pad last layer to 128 output lanes (zeros beyond action_dim).
    OUT_PAD = 128
    w3p = jnp.zeros((w3.shape[0], OUT_PAD), w3.dtype).at[:, :action_dim].set(w3)
    b3p = jnp.zeros((1, OUT_PAD), b3.dtype).at[:, :action_dim].set(b3)

    # Batch tile: multiple of 8 sublanes, capped at block_b rows per grid step.
    tb = min(block_b, _round_up(B, 8))
    b_pad = _round_up(B, tb)

    x = state.astype(jnp.bfloat16)
    if b_pad != B:
        x = jnp.pad(x, ((0, b_pad - B), (0, 0)))

    def const_spec(shape):
        # Weights/biases: same (full) block every grid step -> stay resident in VMEM.
        return pl.BlockSpec(shape, lambda i: (0, 0))

    flat_params = [w0, b0, w1, b1, w2, b2, w3p, b3p]
    in_specs = ([pl.BlockSpec((tb, state_dim), lambda i: (i, 0))]
                + [const_spec(p.shape) for p in flat_params])

    out = pl.pallas_call(
        critic_kernel,
        out_shape=jax.ShapeDtypeStruct((b_pad, OUT_PAD), jnp.float32),
        grid=(b_pad // tb,),
        in_specs=in_specs,
        out_specs=pl.BlockSpec((tb, OUT_PAD), lambda i: (i, 0)),
        compiler_params=pltpu.CompilerParams(dimension_semantics=("parallel",)),
    )(x, *flat_params)

    return out[:B, :action_dim]


def critic_forward_ref(state, params):
    """Plain-JAX reference following the same bf16-matmul / f32-accumulate path."""
    v = jnp.dot(state.astype(jnp.bfloat16), params[0][0],
                preferred_element_type=jnp.float32) + params[0][1]
    for w, b in params[1:]:
        v = jnp.dot(jnp.maximum(v, 0.0).astype(jnp.bfloat16), w,
                    preferred_element_type=jnp.float32) + b
    return v


if __name__ == "__main__":
    key = jax.random.PRNGKey(0)
    state_dim, action_dim = 16, 4

    pkey, xkey1, xkey2 = jax.random.split(key, 3)
    params = make_critic_params(pkey, state_dim, action_dim, hidden_layers=(64, 32, 32))

    # Small batch (single grid step).
    batch = 8
    state = jax.random.normal(xkey1, (batch, state_dim), dtype=jnp.float32)
    out = jax.block_until_ready(critic_forward(state, params))
    ref = critic_forward_ref(state, params)
    assert out.shape == (batch, action_dim)
    assert jnp.allclose(out, ref, atol=1e-3, rtol=1e-3), "mismatch vs reference (small batch)"

    # Larger batch: exercises batch tiling (TB=512, grid=(2,)) and row padding.
    batch2 = 1000
    state2 = jax.random.normal(xkey2, (batch2, state_dim), dtype=jnp.float32)
    out2 = jax.block_until_ready(critic_forward(state2, params))
    ref2 = critic_forward_ref(state2, params)
    assert out2.shape == (batch2, action_dim)
    assert jnp.allclose(out2, ref2, atol=1e-3, rtol=1e-3), "mismatch vs reference (large batch)"

    print("KERNEL_OK")
</pallas_src>

<mosaic_0001>
module attributes {stable_mosaic.version = 11 : i64} {
  func.func @critic_kernel(%arg0: i32, %arg1: memref<8x16xbf16, #tpu.memory_space<vmem>>, %arg2: memref<16x64xbf16, #tpu.memory_space<vmem>>, %arg3: memref<1x64xf32, #tpu.memory_space<vmem>>, %arg4: memref<64x32xbf16, #tpu.memory_space<vmem>>, %arg5: memref<1x32xf32, #tpu.memory_space<vmem>>, %arg6: memref<32x32xbf16, #tpu.memory_space<vmem>>, %arg7: memref<1x32xf32, #tpu.memory_space<vmem>>, %arg8: memref<32x128xbf16, #tpu.memory_space<vmem>>, %arg9: memref<1x128xf32, #tpu.memory_space<vmem>>, %arg10: memref<8x128xf32, #tpu.memory_space<vmem>>) attributes {dimension_semantics = [#tpu.dimension_semantics<parallel>], iteration_bounds = array<i64: 1>, scalar_prefetch = 0 : i64, scratch_operands = 0 : i64, tpu.core_type = #tpu.core_type<tc>, window_params = [{transform_indices = @transform_0, window_bounds = array<i64: 8, 16>}, {pipeline_mode = #tpu.pipeline_mode<synchronous>, transform_indices = @transform_1, window_bounds = array<i64: 16, 64>}, {pipeline_mode = #tpu.pipeline_mode<synchronous>, transform_indices = @transform_2, window_bounds = array<i64: 1, 64>}, {pipeline_mode = #tpu.pipeline_mode<synchronous>, transform_indices = @transform_3, window_bounds = array<i64: 64, 32>}, {pipeline_mode = #tpu.pipeline_mode<synchronous>, transform_indices = @transform_4, window_bounds = array<i64: 1, 32>}, {pipeline_mode = #tpu.pipeline_mode<synchronous>, transform_indices = @transform_5, window_bounds = array<i64: 32, 32>}, {pipeline_mode = #tpu.pipeline_mode<synchronous>, transform_indices = @transform_6, window_bounds = array<i64: 1, 32>}, {pipeline_mode = #tpu.pipeline_mode<synchronous>, transform_indices = @transform_7, window_bounds = array<i64: 32, 128>}, {pipeline_mode = #tpu.pipeline_mode<synchronous>, transform_indices = @transform_8, window_bounds = array<i64: 1, 128>}, {transform_indices = @transform_9, window_bounds = array<i64: 8, 128>}]} {
    %c0 = arith.constant 0 : index
    %c0_0 = arith.constant 0 : index
    %0 = vector.load %arg1[%c0, %c0_0] : memref<8x16xbf16, #tpu.memory_space<vmem>>, vector<8x16xbf16>
    %c0_1 = arith.constant 0 : index
    %c0_2 = arith.constant 0 : index
    %1 = vector.load %arg2[%c0_1, %c0_2] : memref<16x64xbf16, #tpu.memory_space<vmem>>, vector<16x64xbf16>
    %cst = arith.constant dense<0.000000e+00> : vector<8x64xf32>
    %2 = tpu.matmul %0, %1, %cst {dimension_numbers = #tpu.dot_dimension_numbers<[1], [0], [0], [1], [0, 0, 1, 1], [], []>} : vector<8x16xbf16>, vector<16x64xbf16>, vector<8x64xf32> -> vector<8x64xf32>
    %c0_3 = arith.constant 0 : index
    %c0_4 = arith.constant 0 : index
    %3 = vector.load %arg3[%c0_3, %c0_4] : memref<1x64xf32, #tpu.memory_space<vmem>>, vector<1x64xf32>
    %4 = vector.broadcast %3 : vector<1x64xf32> to vector<8x64xf32>
    %5 = arith.addf %2, %4 : vector<8x64xf32>
    %cst_5 = arith.constant 0.000000e+00 : f32
    %6 = vector.broadcast %cst_5 : f32 to vector<8x64xf32>
    %7 = arith.maximumf %5, %6 : vector<8x64xf32>
    %8 = arith.truncf %7 : vector<8x64xf32> to vector<8x64xbf16>
    %c0_6 = arith.constant 0 : index
    %c0_7 = arith.constant 0 : index
    %9 = vector.load %arg4[%c0_6, %c0_7] : memref<64x32xbf16, #tpu.memory_space<vmem>>, vector<64x32xbf16>
    %cst_8 = arith.constant dense<0.000000e+00> : vector<8x32xf32>
    %10 = tpu.matmul %8, %9, %cst_8 {dimension_numbers = #tpu.dot_dimension_numbers<[1], [0], [0], [1], [0, 0, 1, 1], [], []>} : vector<8x64xbf16>, vector<64x32xbf16>, vector<8x32xf32> -> vector<8x32xf32>
    %c0_9 = arith.constant 0 : index
    %c0_10 = arith.constant 0 : index
    %11 = vector.load %arg5[%c0_9, %c0_10] : memref<1x32xf32, #tpu.memory_space<vmem>>, vector<1x32xf32>
    %12 = vector.broadcast %11 : vector<1x32xf32> to vector<8x32xf32>
    %13 = arith.addf %10, %12 : vector<8x32xf32>
    %cst_11 = arith.constant 0.000000e+00 : f32
    %14 = vector.broadcast %cst_11 : f32 to vector<8x32xf32>
    %15 = arith.maximumf %13, %14 : vector<8x32xf32>
    %16 = arith.truncf %15 : vector<8x32xf32> to vector<8x32xbf16>
    %c0_12 = arith.constant 0 : index
    %c0_13 = arith.constant 0 : index
    %17 = vector.load %arg6[%c0_12, %c0_13] : memref<32x32xbf16, #tpu.memory_space<vmem>>, vector<32x32xbf16>
    %cst_14 = arith.constant dense<0.000000e+00> : vector<8x32xf32>
    %18 = tpu.matmul %16, %17, %cst_14 {dimension_numbers = #tpu.dot_dimension_numbers<[1], [0], [0], [1], [0, 0, 1, 1], [], []>} : vector<8x32xbf16>, vector<32x32xbf16>, vector<8x32xf32> -> vector<8x32xf32>
    %c0_15 = arith.constant 0 : index
    %c0_16 = arith.constant 0 : index
    %19 = vector.load %arg7[%c0_15, %c0_16] : memref<1x32xf32, #tpu.memory_space<vmem>>, vector<1x32xf32>
    %20 = vector.broadcast %19 : vector<1x32xf32> to vector<8x32xf32>
    %21 = arith.addf %18, %20 : vector<8x32xf32>
    %cst_17 = arith.constant 0.000000e+00 : f32
    %22 = vector.broadcast %cst_17 : f32 to vector<8x32xf32>
    %23 = arith.maximumf %21, %22 : vector<8x32xf32>
    %24 = arith.truncf %23 : vector<8x32xf32> to vector<8x32xbf16>
    %c0_18 = arith.constant 0 : index
    %c0_19 = arith.constant 0 : index
    %25 = vector.load %arg8[%c0_18, %c0_19] : memref<32x128xbf16, #tpu.memory_space<vmem>>, vector<32x128xbf16>
    %cst_20 = arith.constant dense<0.000000e+00> : vector<8x128xf32>
    %26 = tpu.matmul %24, %25, %cst_20 {dimension_numbers = #tpu.dot_dimension_numbers<[1], [0], [0], [1], [0, 0, 1, 1], [], []>} : vector<8x32xbf16>, vector<32x128xbf16>, vector<8x128xf32> -> vector<8x128xf32>
    %c0_21 = arith.constant 0 : index
    %c0_22 = arith.constant 0 : index
    %27 = vector.load %arg9[%c0_21, %c0_22] : memref<1x128xf32, #tpu.memory_space<vmem>>, vector<1x128xf32>
    %28 = vector.broadcast %27 : vector<1x128xf32> to vector<8x128xf32>
    %29 = arith.addf %26, %28 : vector<8x128xf32>
    %c0_23 = arith.constant 0 : index
    %c0_24 = arith.constant 0 : index
    %30 = vector.load %arg10[%c0_23, %c0_24] : memref<8x128xf32, #tpu.memory_space<vmem>>, vector<8x128xf32>
    tpu.vector_store %arg10[%c0_23, %c0_24], %29 {strides = array<i32>} : memref<8x128xf32, #tpu.memory_space<vmem>>, vector<8x128xf32>,
    return
  }
  func.func @transform_0(%arg0: i32) -> (i32, i32) {
    %c0_i32 = arith.constant 0 : i32
    %c0_i32_0 = arith.constant 0 : i32
    return %arg0, %c0_i32 : i32, i32
  }
  func.func @transform_1(%arg0: i32) -> (i32, i32) {
    %c0_i32 = arith.constant 0 : i32
    %c0_i32_0 = arith.constant 0 : i32
    %c0_i32_1 = arith.constant 0 : i32
    return %c0_i32, %c0_i32_0 : i32, i32
  }
  func.func @transform_2(%arg0: i32) -> (i32, i32) {
    %c0_i32 = arith.constant 0 : i32
    %c0_i32_0 = arith.constant 0 : i32
    %c0_i32_1 = arith.constant 0 : i32
    return %c0_i32, %c0_i32_0 : i32, i32
  }
  func.func @transform_3(%arg0: i32) -> (i32, i32) {
    %c0_i32 = arith.constant 0 : i32
    %c0_i32_0 = arith.constant 0 : i32
    %c0_i32_1 = arith.constant 0 : i32
    return %c0_i32, %c0_i32_0 : i32, i32
  }
  func.func @transform_4(%arg0: i32) -> (i32, i32) {
    %c0_i32 = arith.constant 0 : i32
    %c0_i32_0 = arith.constant 0 : i32
    %c0_i32_1 = arith.constant 0 : i32
    return %c0_i32, %c0_i32_0 : i32, i32
  }
  func.func @transform_5(%arg0: i32) -> (i32, i32) {
    %c0_i32 = arith.constant 0 : i32
    %c0_i32_0 = arith.constant 0 : i32
    %c0_i32_1 = arith.constant 0 : i32
    return %c0_i32, %c0_i32_0 : i32, i32
  }
  func.func @transform_6(%arg0: i32) -> (i32, i32) {
    %c0_i32 = arith.constant 0 : i32
    %c0_i32_0 = arith.constant 0 : i32
    %c0_i32_1 = arith.constant 0 : i32
    return %c0_i32, %c0_i32_0 : i32, i32
  }
  func.func @transform_7(%arg0: i32) -> (i32, i32) {
    %c0_i32 = arith.constant 0 : i32
    %c0_i32_0 = arith.constant 0 : i32
    %c0_i32_1 = arith.constant 0 : i32
    return %c0_i32, %c0_i32_0 : i32, i32
  }
  func.func @transform_8(%arg0: i32) -> (i32, i32) {
    %c0_i32 = arith.constant 0 : i32
    %c0_i32_0 = arith.constant 0 : i32
    %c0_i32_1 = arith.constant 0 : i32
    return %c0_i32, %c0_i32_0 : i32, i32
  }
  func.func @transform_9(%arg0: i32) -> (i32, i32) {
    %c0_i32 = arith.constant 0 : i32
    %c0_i32_0 = arith.constant 0 : i32
    return %arg0, %c0_i32 : i32, i32
  }
}

</mosaic_0001>

<llo_original>
// kernel: tpu_custom_call.1
$region0: #{tpu_custom_call.1}
  #allocation0 [shape = 'u32[]', space=smem, size = 0x4, offset = 0x4, fixed_abs, tag = 'smem constant byte address 0x4 - core index']
  #allocation1 [shape = 'u32[144,128]{1,0:T(1,128)}', space=vmem, size = 0x12000, scoped, tag = 'internal scratch']
  %s0 = inlined_call_operand.vmem [shape: bf16[8,16], index: 0, kind: input, shape index: {}]
  %s1 = inlined_call_operand.vmem [shape: bf16[16,64], index: 1, kind: input, shape index: {}]
  %s2 = inlined_call_operand.vmem [shape: f32[1,64], index: 2, kind: input, shape index: {}]
  %s3 = inlined_call_operand.vmem [shape: bf16[64,32], index: 3, kind: input, shape index: {}]
  %s4 = inlined_call_operand.vmem [shape: f32[1,32], index: 4, kind: input, shape index: {}]
  %s5 = inlined_call_operand.vmem [shape: bf16[32,32], index: 5, kind: input, shape index: {}]
  %s6 = inlined_call_operand.vmem [shape: f32[1,32], index: 6, kind: input, shape index: {}]
  %s7 = inlined_call_operand.vmem [shape: bf16[32,128], index: 7, kind: input, shape index: {}]
  %s8 = inlined_call_operand.vmem [shape: f32[1,128], index: 8, kind: input, shape index: {}]
  %s9 = inlined_call_operand.hbm [shape: f32[8,128], index: 9, kind: output, shape index: {}]
  %s10 = sld [smem:[#allocation0]]
  $region46: #{tpu_custom_call.1} parent=0
    _
  %s12 = ssub.s32 1, %s10
  %s13 = scalar_select 0, %s12, %s10
  $region1: #{tpu_custom_call.1} parent=0
    #allocation2 [shape = 'u8[4096]{0}', space=vmem, size = 0x1000, scoped, tag = 'output window, operand 0, single buffered']
    #allocation3 [shape = 's32[1]{0}', space=sflag, size = 0x4, scoped, tag = 'scoped memory for tpu_custom_call.1']
    %14 = vsyncpa [#allocation3], 0
    // Predicated region
    $region2: #{tpu_custom_call.1} parent=1 // pred_check
      _
    $region3: #{tpu_custom_call.1} parent=1 // pred_check_branch
      %16 = sbr.rel (0) target = $region5
    $region4: #{tpu_custom_call.1} parent=1 // pred_region
      _
    $region5: #{tpu_custom_call.1} parent=1 // pred_fallthru
      _
    // Predicated region
    $region6: #{tpu_custom_call.1} parent=1 // pred_check
      _
    $region7: #{tpu_custom_call.1} parent=1 // pred_check_branch
      %18 = sbr.rel (0) target = $region9
    $region8: #{tpu_custom_call.1} parent=1 // pred_region
      _
    $region9: #{tpu_custom_call.1} parent=1 // pred_fallthru
      _
    // Predicated region
    $region10: #{tpu_custom_call.1} parent=1 // pred_check
      _
    $region11: #{tpu_custom_call.1} parent=1 // pred_check_branch
      %20 = sbr.rel (0) target = $region13
    $region12: #{tpu_custom_call.1} parent=1 // pred_region
      _
    $region13: #{tpu_custom_call.1} parent=1 // pred_fallthru
      _
    // Predicated region
    $region14: #{tpu_custom_call.1} parent=1 // pred_check
      _
    $region15: #{tpu_custom_call.1} parent=1 // pred_check_branch
      %22 = sbr.rel (0) target = $region17
    $region16: #{tpu_custom_call.1} parent=1 // pred_region
      _
    $region17: #{tpu_custom_call.1} parent=1 // pred_fallthru
      _
    // Predicated region
    $region18: #{tpu_custom_call.1} parent=1 // pred_check
      _
    $region19: #{tpu_custom_call.1} parent=1 // pred_check_branch
      %24 = sbr.rel (0) target = $region21
    $region20: #{tpu_custom_call.1} parent=1 // pred_region
      _
    $region21: #{tpu_custom_call.1} parent=1 // pred_fallthru
      _
    // Predicated region
    $region22: #{tpu_custom_call.1} parent=1 // pred_check
      _
    $region23: #{tpu_custom_call.1} parent=1 // pred_check_branch
      %26 = sbr.rel (0) target = $region25
    $region24: #{tpu_custom_call.1} parent=1 // pred_region
      _
    $region25: #{tpu_custom_call.1} parent=1 // pred_fallthru
      _
    // Predicated region
    $region26: #{tpu_custom_call.1} parent=1 // pred_check
      _
    $region27: #{tpu_custom_call.1} parent=1 // pred_check_branch
      %28 = sbr.rel (0) target = $region29
    $region28: #{tpu_custom_call.1} parent=1 // pred_region
      _
    $region29: #{tpu_custom_call.1} parent=1 // pred_fallthru
      _
    // Predicated region
    $region30: #{tpu_custom_call.1} parent=1 // pred_check
      _
    $region31: #{tpu_custom_call.1} parent=1 // pred_check_branch
      %30 = sbr.rel (0) target = $region33
    $region32: #{tpu_custom_call.1} parent=1 // pred_region
      _
    $region33: #{tpu_custom_call.1} parent=1 // pred_fallthru
      _
    // Predicated region
    $region34: #{tpu_custom_call.1} parent=1 // pred_check
      _
    $region35: #{tpu_custom_call.1} parent=1 // pred_check_branch
      %32 = sbr.rel (0) target = $region37
    $region36: #{tpu_custom_call.1} parent=1 // pred_region
      _
    $region37: #{tpu_custom_call.1} parent=1 // pred_fallthru
      _
    %v34 = vld [vmem:[%s0] sm:$0xf]
    %v35 = vld [vmem:[%s1] sm:$0xf]
    %v36 = vld [vmem:[%s1 + $0x4] sm:$0xf]
    %v37 = vld [vmem:[%s2] sm:$0x1]
    %v39 = vlaneseq
    %v40 = vshrl.u32 %v39, 7
    %v41 = vsub.s32 0, %v40
    %v42 = vrot.slane %v37, %v41
    %v46 = vunpack.c.l.b16 %v35
    %v47 = vunpack.c.l.b16 %v36
    %v48 = vpack.c.b16 %v47, %v46
    %vm50 = vcmask 130048
    %v52 = vsel %vm50, %v34, 0
    %54 = vmatprep.subr.bf16.mxu0 0
    %55 = vmatpush1.bf16.msra.mxu0 %v48
    %56 = vmatprep.subr.bf16.mxu0 0
    %57 = vmatpush1.bf16.msra.mxu0 0
    %58 = vmatprep.subr.bf16.mxu0 0
    %59 = vmatpush1.bf16.msra.mxu0 0
    %60 = vmatprep.subr.bf16.mxu0 0
    %61 = vmatpush1.bf16.msra.mxu0 0
    %62 = vmatprep.subr.bf16.mxu0 0
    %63 = vmatpush1.bf16.msra.mxu0 0
    %64 = vmatprep.subr.bf16.mxu0 0
    %65 = vmatpush1.bf16.msra.mxu0 0
    %66 = vmatprep.subr.bf16.mxu0 0
    %67 = vmatpush1.bf16.msra.mxu0 0
    %68 = vmatprep.subr.bf16.mxu0 0
    %69 = vmatpush1.bf16.msra.mxu0 0
    %70 = vmatprep.subr.bf16.mxu0 0
    %71 = vmatpush1.bf16.msra.mxu0 0
    %72 = vmatprep.subr.bf16.mxu0 0
    %73 = vmatpush1.bf16.msra.mxu0 0
    %74 = vmatprep.subr.bf16.mxu0 0
    %75 = vmatpush1.bf16.msra.mxu0 0
    %76 = vmatprep.subr.bf16.mxu0 0
    %77 = vmatpush1.bf16.msra.mxu0 0
    %78 = vmatprep.subr.bf16.mxu0 0
    %79 = vmatpush1.bf16.msra.mxu0 0
    %80 = vmatprep.subr.bf16.mxu0 0
    %81 = vmatpush1.bf16.msra.mxu0 0
    %82 = vmatprep.subr.bf16.mxu0 0
    %83 = vmatpush1.bf16.msra.mxu0 0
    %84 = vmatprep.subr.bf16.mxu0 0
    %85 = vmatpush1.bf16.msra.mxu0 0
    %86 = vmatprep.mubr.bf16.mxu0 0
    %87 = vmatmul.mubr.bf16.gmra.mrb[0].mxu0 %v52
    %v88 = vpop.f32.mrb[0].mxu0
    %v89 = vadd.f32 %v42, %v88
    %v90 = vpop.f32.mrb[0].mxu0
    %v91 = vpop.f32.mrb[0].mxu0
    %v92 = vpop.f32.mrb[0].mxu0
    %93 = vdwg.mxu0
    %v94 = vmax.f32 %v89, 0.0
    %v95 = vpack.c.bf16 %v94, %v94
    %v96 = vld [vmem:[%s3] sm:$0xf]
    %v97 = vld [vmem:[%s3 + $0x4] sm:$0xf]
    %v98 = vld [vmem:[%s3 + $0x8] sm:$0xf]
    %v99 = vld [vmem:[%s3 + $0xc] sm:$0xf]
    %v100 = vld [vmem:[%s3 + $0x10] sm:$0xf]
    %v101 = vld [vmem:[%s3 + $0x14] sm:$0xf]
    %v102 = vld [vmem:[%s3 + $0x18] sm:$0xf]
    %v103 = vld [vmem:[%s3 + $0x1c] sm:$0xf]
    %v104 = vld [vmem:[%s4] sm:$0x1]
    %v106 = vlaneseq
    %v107 = vshrl.u32 %v106, 7
    %v108 = vsub.s32 0, %v107
    %v109 = vrot.slane %v104, %v108
    %v119 = vunpack.c.l.b16 %v96
    %v120 = vunpack.c.l.b16 %v97
    %v121 = vunpack.c.l.b16 %v98
    %v122 = vunpack.c.l.b16 %v99
    %v123 = vunpack.c.l.b16 %v100
    %v124 = vunpack.c.l.b16 %v101
    %v125 = vunpack.c.l.b16 %v102
    %v126 = vunpack.c.l.b16 %v103
    %v127 = vpack.c.b16 %v120, %v119
    %v128 = vpack.c.b16 %v122, %v121
    %v129 = vpack.c.b16 %v124, %v123
    %v130 = vpack.c.b16 %v126, %v125
    %vm135 = vcmask 523264
    %v137 = vsel %vm135, %v95, 0
    %139 = vmatprep.subr.bf16.mxu0 0
    %140 = vmatpush1.bf16.msra.mxu0 %v127
    %141 = vmatprep.subr.bf16.mxu0 0
    %142 = vmatpush1.bf16.msra.mxu0 %v128
    %143 = vmatprep.subr.bf16.mxu0 0
    %144 = vmatpush1.bf16.msra.mxu0 %v129
    %145 = vmatprep.subr.bf16.mxu0 0
    %146 = vmatpush1.bf16.msra.mxu0 %v130
    %147 = vmatprep.subr.bf16.mxu0 0
    %148 = vmatpush1.bf16.msra.mxu0 0
    %149 = vmatprep.subr.bf16.mxu0 0
    %150 = vmatpush1.bf16.msra.mxu0 0
    %151 = vmatprep.subr.bf16.mxu0 0
    %152 = vmatpush1.bf16.msra.mxu0 0
    %153 = vmatprep.subr.bf16.mxu0 0
    %154 = vmatpush1.bf16.msra.mxu0 0
    %155 = vmatprep.subr.bf16.mxu0 0
    %156 = vmatpush1.bf16.msra.mxu0 0
    %157 = vmatprep.subr.bf16.mxu0 0
    %158 = vmatpush1.bf16.msra.mxu0 0
    %159 = vmatprep.subr.bf16.mxu0 0
    %160 = vmatpush1.bf16.msra.mxu0 0
    %161 = vmatprep.subr.bf16.mxu0 0
    %162 = vmatpush1.bf16.msra.mxu0 0
    %163 = vmatprep.subr.bf16.mxu0 0
    %164 = vmatpush1.bf16.msra.mxu0 0
    %165 = vmatprep.subr.bf16.mxu0 0
    %166 = vmatpush1.bf16.msra.mxu0 0
    %167 = vmatprep.subr.bf16.mxu0 0
    %168 = vmatpush1.bf16.msra.mxu0 0
    %169 = vmatprep.subr.bf16.mxu0 0
    %170 = vmatpush1.bf16.msra.mxu0 0
    %171 = vmatprep.mubr.bf16.mxu0 0
    %172 = vmatmul.mubr.bf16.gmra.mrb[0].mxu0 %v137
    %v173 = vpop.f32.mrb[0].mxu0
    %v174 = vadd.f32 %v109, %v173
    %v175 = vpop.f32.mrb[0].mxu0
    %v176 = vpop.f32.mrb[0].mxu0
    %v177 = vpop.f32.mrb[0].mxu0
    %178 = vdwg.mxu0
    %v179 = vmax.f32 %v174, 0.0
    %v180 = vpack.c.bf16 %v179, %v179
    %v181 = vld [vmem:[%s5] sm:$0xf]
    %v182 = vld [vmem:[%s5 + $0x4] sm:$0xf]
    %v183 = vld [vmem:[%s5 + $0x8] sm:$0xf]
    %v184 = vld [vmem:[%s5 + $0xc] sm:$0xf]
    %v185 = vld [vmem:[%s6] sm:$0x1]
    %v187 = vlaneseq
    %v188 = vshrl.u32 %v187, 7
    %v189 = vsub.s32 0, %v188
    %v190 = vrot.slane %v185, %v189
    %v196 = vunpack.c.l.b16 %v181
    %v197 = vunpack.c.l.b16 %v182
    %v198 = vunpack.c.l.b16 %v183
    %v199 = vunpack.c.l.b16 %v184
    %v200 = vpack.c.b16 %v197, %v196
    %v201 = vpack.c.b16 %v199, %v198
    %vm204 = vcmask 261120
    %v206 = vsel %vm204, %v180, 0
    %208 = vmatprep.subr.bf16.mxu0 0
    %209 = vmatpush1.bf16.msra.mxu0 %v200
    %210 = vmatprep.subr.bf16.mxu0 0
    %211 = vmatpush1.bf16.msra.mxu0 %v201
    %212 = vmatprep.subr.bf16.mxu0 0
    %213 = vmatpush1.bf16.msra.mxu0 0
    %214 = vmatprep.subr.bf16.mxu0 0
    %215 = vmatpush1.bf16.msra.mxu0 0
    %216 = vmatprep.subr.bf16.mxu0 0
    %217 = vmatpush1.bf16.msra.mxu0 0
    %218 = vmatprep.subr.bf16.mxu0 0
    %219 = vmatpush1.bf16.msra.mxu0 0
    %220 = vmatprep.subr.bf16.mxu0 0
    %221 = vmatpush1.bf16.msra.mxu0 0
    %222 = vmatprep.subr.bf16.mxu0 0
    %223 = vmatpush1.bf16.msra.mxu0 0
    %224 = vmatprep.subr.bf16.mxu0 0
    %225 = vmatpush1.bf16.msra.mxu0 0
    %226 = vmatprep.subr.bf16.mxu0 0
    %227 = vmatpush1.bf16.msra.mxu0 0
    %228 = vmatprep.subr.bf16.mxu0 0
    %229 = vmatpush1.bf16.msra.mxu0 0
    %230 = vmatprep.subr.bf16.mxu0 0
    %231 = vmatpush1.bf16.msra.mxu0 0
    %232 = vmatprep.subr.bf16.mxu0 0
    %233 = vmatpush1.bf16.msra.mxu0 0
    %234 = vmatprep.subr.bf16.mxu0 0
    %235 = vmatpush1.bf16.msra.mxu0 0
    %236 = vmatprep.subr.bf16.mxu0 0
    %237 = vmatpush1.bf16.msra.mxu0 0
    %238 = vmatprep.subr.bf16.mxu0 0
    %239 = vmatpush1.bf16.msra.mxu0 0
    %240 = vmatprep.mubr.bf16.mxu0 0
    %241 = vmatmul.mubr.bf16.gmra.mrb[0].mxu0 %v206
    %v242 = vpop.f32.mrb[0].mxu0
    %v243 = vadd.f32 %v190, %v242
    %v244 = vpop.f32.mrb[0].mxu0
    %v245 = vpop.f32.mrb[0].mxu0
    %v246 = vpop.f32.mrb[0].mxu0
    %247 = vdwg.mxu0
    %v248 = vmax.f32 %v243, 0.0
    %v249 = vpack.c.bf16 %v248, %v248
    %v250 = vld [vmem:[%s7] sm:$0xf]
    %v251 = vld [vmem:[%s7 + $0x4] sm:$0xf]
    %v252 = vld [vmem:[%s7 + $0x8] sm:$0xf]
    %v253 = vld [vmem:[%s7 + $0xc] sm:$0xf]
    %v254 = vld [vmem:[%s8] sm:$0x1]
    %v256 = vlaneseq
    %v257 = vshrl.u32 %v256, 7
    %v258 = vsub.s32 0, %v257
    %v259 = vrot.slane %v254, %v258
    %v265 = vunpack.c.l.b16 %v250
    %v266 = vunpack.c.l.b16 %v251
    %v267 = vunpack.c.l.b16 %v252
    %v268 = vunpack.c.l.b16 %v253
    %v269 = vpack.c.b16 %v266, %v265
    %v270 = vpack.c.b16 %v268, %v267
    %v274 = vsel %vm204, %v249, 0
    %276 = vmatprep.subr.bf16.mxu0 0
    %277 = vmatpush1.bf16.msra.mxu0 %v269
    %278 = vmatprep.subr.bf16.mxu0 0
    %279 = vmatpush1.bf16.msra.mxu0 %v270
    %280 = vmatprep.subr.bf16.mxu0 0
    %281 = vmatpush1.bf16.msra.mxu0 0
    %282 = vmatprep.subr.bf16.mxu0 0
    %283 = vmatpush1.bf16.msra.mxu0 0
    %284 = vmatprep.subr.bf16.mxu0 0
    %285 = vmatpush1.bf16.msra.mxu0 0
    %286 = vmatprep.subr.bf16.mxu0 0
    %287 = vmatpush1.bf16.msra.mxu0 0
    %288 = vmatprep.subr.bf16.mxu0 0
    %289 = vmatpush1.bf16.msra.mxu0 0
    %290 = vmatprep.subr.bf16.mxu0 0
    %291 = vmatpush1.bf16.msra.mxu0 0
    %292 = vmatprep.subr.bf16.mxu0 0
    %293 = vmatpush1.bf16.msra.mxu0 0
    %294 = vmatprep.subr.bf16.mxu0 0
    %295 = vmatpush1.bf16.msra.mxu0 0
    %296 = vmatprep.subr.bf16.mxu0 0
    %297 = vmatpush1.bf16.msra.mxu0 0
    %298 = vmatprep.subr.bf16.mxu0 0
    %299 = vmatpush1.bf16.msra.mxu0 0
    %300 = vmatprep.subr.bf16.mxu0 0
    %301 = vmatpush1.bf16.msra.mxu0 0
    %302 = vmatprep.subr.bf16.mxu0 0
    %303 = vmatpush1.bf16.msra.mxu0 0
    %304 = vmatprep.subr.bf16.mxu0 0
    %305 = vmatpush1.bf16.msra.mxu0 0
    %306 = vmatprep.subr.bf16.mxu0 0
    %307 = vmatpush1.bf16.msra.mxu0 0
    %308 = vmatprep.mubr.bf16.mxu0 0
    %309 = vmatmul.mubr.bf16.gmra.mrb[0].mxu0 %v274
    %v310 = vpop.f32.mrb[0].mxu0
    %v311 = vadd.f32 %v259, %v310
    %v312 = vpop.f32.mrb[0].mxu0
    %v313 = vpop.f32.mrb[0].mxu0
    %v314 = vpop.f32.mrb[0].mxu0
    %315 = vdwg.mxu0
    %316 = vst [vmem:[#allocation2] sm:$0xff] %v311
    // Predicated region
    $region38: #{tpu_custom_call.1} parent=1 // pred_check
      _
    $region39: #{tpu_custom_call.1} parent=1 // pred_check_branch
      %318 = sbr.rel (0) target = $region41
    $region40: #{tpu_custom_call.1} parent=1 // pred_region
      %s320 = ssub.s32 128, 128
      %321 = vsyncadd [#allocation3], %s320
      %s323 = sshll.u32 [#allocation2], 4
      %s324 = int_to_ptr.vmem [resolvable:$true] %s323
      %326 = dma.vmem_to_hbm [thread:$0]  %s324, 128, %s9, [#allocation3]
    $region41: #{tpu_custom_call.1} parent=1 // pred_fallthru
      _
    // Predicated region
    $region42: #{tpu_custom_call.1} parent=1 // pred_check
      _
    $region43: #{tpu_custom_call.1} parent=1 // pred_check_branch
      %328 = sbr.rel (0) target = $region45
    $region44: #{tpu_custom_call.1} parent=1 // pred_region
      %329 = dma.done [#allocation3], 128
    $region45: #{tpu_custom_call.1} parent=1 // pred_fallthru
      _
    %330 = vsyncpa [#allocation3], 1

</llo_original>
